<compile_context>
chip_gen: v6e
topology: v6e:2x2x1
jax: 0.10.0
libtpu: 0.0.40
codegen_flags: <defaults>
</compile_context>

<pallas_src>
import functools

import jax
import jax.numpy as jnp
from jax import lax
from jax.experimental import pallas as pl
from jax.experimental.pallas import tpu as pltpu


def _round_up(v: int, m: int) -> int:
    return ((v + m - 1) // m) * m


def _linearnet_kernel(x_ref, w_ref, o_ref, *acc, norm: bool, eps: float):
    """One grid step of  out = maybe_layernorm(x) @ w^T.

    x_ref : (tm, tk) f32   row block of the context matrix
    w_ref : (tk, tn) bf16  weight block, already transposed to (D, A) in the wrapper
    o_ref : (tm, tn)       output block
    acc   : ()             single-K path -> write o_ref directly (no scratch)
            (acc_ref,)     k-tiled path  -> f32 VMEM accumulator across k
    """
    if norm:
        # LayerNorm (elementwise_affine=False). The single-K path never pads D,
        # so the whole last axis is valid -> no masking needed. Recomputed per
        # (i, j) tile: two VPU passes over (tm, D) are trivially cheaper than the
        # (tm, tn, D) matmul and keep both grid axes megacore-parallel.
        x = x_ref[...].astype(jnp.float32)
        mean = jnp.mean(x, axis=-1, keepdims=True)
        centered = x - mean
        var = jnp.mean(centered * centered, axis=-1, keepdims=True)
        x_bf = (centered * lax.rsqrt(var + eps)).astype(jnp.bfloat16)
    else:
        x_bf = x_ref[...].astype(jnp.bfloat16)

    partial = jnp.dot(x_bf, w_ref[...], preferred_element_type=jnp.float32)

    if not acc:
        # Single k block: store straight to the (resident) output block.
        o_ref[...] = partial.astype(o_ref.dtype)
    else:
        # k-tiled reduction: f32 accumulator, init at k==0, store at k==last.
        acc_ref, = acc
        k = pl.program_id(2)

        @pl.when(k == 0)
        def _():
            acc_ref[...] = jnp.zeros_like(acc_ref)

        acc_ref[...] += partial

        @pl.when(k == pl.num_programs(2) - 1)
        def _():
            o_ref[...] = acc_ref[...].astype(o_ref.dtype)


def _pick_row_tile(n: int, feat_cols: int, target: int) -> int:
    """Row tile: big enough to amortize per-step overhead, split into >=2 blocks
    when possible (v7x has 2 TensorCores sharing the 'parallel' grid axes), and
    bounded so the double-buffered f32 x block stays <= ~8 MiB per buffer."""
    n8 = _round_up(n, 8)
    tm = min(target, n8)
    if n8 > 8:
        tm = min(tm, _round_up(pl.cdiv(n8, 2), 8))
    budget_rows = max(8, ((2 * 1024 * 1024) // max(feat_cols, 1)) // 8 * 8)
    return max(8, min(tm, budget_rows))


def linearnet_forward(x, weight, *, norm: bool = False, eps: float = 1e-5):
    """LinearNet forward: y = Linear(LayerNorm?(x)), bias=False, affine=False.

    x      : (N, D) context vectors
    weight : (A, D) torch nn.Linear weight layout
    returns: (N, A) predicted per-arm rewards, dtype == x.dtype
    """
    N, D = x.shape
    A, D2 = weight.shape
    assert D == D2, (D, D2)
    out_dtype = x.dtype
    out_isz = jnp.dtype(out_dtype).itemsize
    x_isz = jnp.dtype(x.dtype).itemsize

    # One-time wrapper-side transpose + bf16 cast of the (small) weight:
    #  * (D, A) layout feeds the MXU as a plain (M,K)x(K,N) contraction -- no risk
    #    of a per-step XLU transpose from an NT dot_general,
    #  * bf16 halves weight DMA and its double-buffered VMEM footprint.
    w_t = weight.astype(jnp.bfloat16).T                       # (D, A)

    single_k = norm or D <= 4096

    if single_k:
        # ---- Path 1: whole feature dim in one block (norm, and/or small D) ----
        if A <= 512:
            tn, a_pad = A, A            # keep arms unpadded: masked narrow stores
        else:                           # beat 32x padded output HBM traffic
            tn = 256                    # lane-dense arm tiles for large A
            a_pad = _round_up(A, tn)
            w_t = jnp.pad(w_t, ((0, 0), (0, a_pad - A)))

        tm = _pick_row_tile(N, D, target=1024)
        n_pad = _round_up(N, tm)
        if n_pad != N:
            x = jnp.pad(x, ((0, n_pad - N), (0, 0)))          # D stays unpadded

        grid = (n_pad // tm, a_pad // tn)
        vmem_bytes = (2 * tm * D * x_isz       # x, double-buffered (f32)
                      + 2 * D * tn * 2         # w^T, double-buffered (bf16)
                      + 2 * tm * tn * out_isz)  # out, double-buffered

        out = pl.pallas_call(
            functools.partial(_linearnet_kernel, norm=norm, eps=float(eps)),
            out_shape=jax.ShapeDtypeStruct((n_pad, a_pad), out_dtype),
            grid_spec=pltpu.PrefetchScalarGridSpec(
                num_scalar_prefetch=0,
                grid=grid,
                in_specs=[
                    pl.BlockSpec((tm, D), lambda i, j: (i, 0)),   # x: const over j
                    pl.BlockSpec((D, tn), lambda i, j: (0, j)),   # w^T
                ],
                out_specs=pl.BlockSpec((tm, tn), lambda i, j: (i, j)),
            ),
            compiler_params=pltpu.CompilerParams(
                dimension_semantics=("parallel", "parallel"),
                vmem_limit_bytes=min(64 << 20, 2 * vmem_bytes + (8 << 20)),
            ),
        )(x, w_t)
    else:
        # ---- Path 2: norm=False with large D -> k-tiled reduction ----
        tk = 1024
        tn = min(256, _round_up(A, 128))
        tm = _pick_row_tile(N, tk, target=256)
        n_pad = _round_up(N, tm)
        a_pad = _round_up(A, tn)
        d_pad = _round_up(D, tk)
        if (n_pad, d_pad) != (N, D):
            x = jnp.pad(x, ((0, n_pad - N), (0, d_pad - D)))
        if (d_pad, a_pad) != (D, A):
            w_t = jnp.pad(w_t, ((0, d_pad - D), (0, a_pad - A)))

        grid = (n_pad // tm, a_pad // tn, d_pad // tk)
        vmem_bytes = (2 * tm * tk * x_isz + 2 * tk * tn * 2
                      + 2 * tm * tn * out_isz + tm * tn * 4)

        out = pl.pallas_call(
            functools.partial(_linearnet_kernel, norm=False, eps=float(eps)),
            out_shape=jax.ShapeDtypeStruct((n_pad, a_pad), out_dtype),
            grid_spec=pltpu.PrefetchScalarGridSpec(
                num_scalar_prefetch=0,
                grid=grid,
                in_specs=[
                    pl.BlockSpec((tm, tk), lambda i, j, k: (i, k)),
                    pl.BlockSpec((tk, tn), lambda i, j, k: (k, j)),
                ],
                out_specs=pl.BlockSpec((tm, tn), lambda i, j, k: (i, j)),
                scratch_shapes=[pltpu.VMEM((tm, tn), jnp.float32)],
            ),
            compiler_params=pltpu.CompilerParams(
                dimension_semantics=("parallel", "parallel", "arbitrary"),
                vmem_limit_bytes=min(64 << 20, 2 * vmem_bytes + (8 << 20)),
            ),
        )(x, w_t)

    return out[:N, :A]


def _reference_f32(x, weight, *, norm, eps=1e-5):
    """Pure-f32 PyTorch-equivalent math."""
    xf = x.astype(jnp.float32)
    if norm:
        mean = jnp.mean(xf, axis=-1, keepdims=True)
        var = jnp.mean((xf - mean) ** 2, axis=-1, keepdims=True)
        xf = (xf - mean) * lax.rsqrt(var + eps)
    return xf @ weight.astype(jnp.float32).T


def _reference_bf16(x, weight, *, norm, eps=1e-5):
    """Mirrors kernel numerics: f32 LayerNorm, bf16 MXU operands, f32 accumulate."""
    xf = x.astype(jnp.float32)
    if norm:
        mean = jnp.mean(xf, axis=-1, keepdims=True)
        var = jnp.mean((xf - mean) ** 2, axis=-1, keepdims=True)
        xf = (xf - mean) * lax.rsqrt(var + eps)
    return jnp.dot(xf.astype(jnp.bfloat16), weight.astype(jnp.bfloat16).T,
                   preferred_element_type=jnp.float32)


if __name__ == "__main__":
    key = jax.random.PRNGKey(0)

    def make_inputs(k, n, d, a):
        kx, kw = jax.random.split(k)
        xv = jax.random.normal(kx, (n, d), dtype=jnp.float32)
        bound = 1.0 / jnp.sqrt(jnp.float32(d))   # nn.Linear default init range
        wv = jax.random.uniform(kw, (a, d), dtype=jnp.float32,
                                minval=-bound, maxval=bound)
        return xv, wv

    k0, k1, k2 = jax.random.split(key, 3)

    # Primary shapes implied by the module: (N, dim_context) = (8, 32), num_arms = 4.
    x, w = make_inputs(k0, 8, 32, 4)
    out_plain = jax.block_until_ready(linearnet_forward(x, w, norm=False))
    out_norm = jax.block_until_ready(linearnet_forward(x, w, norm=True))
    assert out_plain.shape == (8, 4) and out_norm.shape == (8, 4)
    assert jnp.allclose(out_plain, _reference_bf16(x, w, norm=False), atol=2e-3, rtol=2e-3)
    assert jnp.allclose(out_norm, _reference_bf16(x, w, norm=True), atol=2e-3, rtol=2e-3)
    assert jnp.allclose(out_plain, _reference_f32(x, w, norm=False), atol=2e-2, rtol=2e-2)
    assert jnp.allclose(out_norm, _reference_f32(x, w, norm=True), atol=2e-2, rtol=2e-2)

    # Secondary: arm-tiled single-K branch (A > 512, D unpadded / not a multiple of 128).
    x2, w2 = make_inputs(k1, 48, 300, 520)
    out2 = jax.block_until_ready(linearnet_forward(x2, w2, norm=True))
    assert out2.shape == (48, 520)
    assert jnp.allclose(out2, _reference_bf16(x2, w2, norm=True), atol=5e-3, rtol=5e-3)

    # Secondary: k-tiled large-D branch (norm=False, D > 4096, f32 accumulator).
    x3, w3 = make_inputs(k2, 40, 4608, 24)
    out3 = jax.block_until_ready(linearnet_forward(x3, w3, norm=False))
    assert out3.shape == (40, 24)
    assert jnp.allclose(out3, _reference_bf16(x3, w3, norm=False), atol=5e-3, rtol=5e-3)

    print("KERNEL_OK")
</pallas_src>

<mosaic_0001>
module attributes {stable_mosaic.version = 11 : i64} {
  func.func @_linearnet_kernel(%arg0: i32, %arg1: i32, %arg2: memref<8x32xf32, #tpu.memory_space<vmem>>, %arg3: memref<32x4xbf16, #tpu.memory_space<vmem>>, %arg4: memref<8x4xf32, #tpu.memory_space<vmem>>) attributes {dimension_semantics = [#tpu.dimension_semantics<parallel>, #tpu.dimension_semantics<parallel>], iteration_bounds = array<i64: 1, 1>, scalar_prefetch = 0 : i64, scratch_operands = 0 : i64, tpu.core_type = #tpu.core_type<tc>, window_params = [{transform_indices = @transform_0, window_bounds = array<i64: 8, 32>}, {transform_indices = @transform_1, window_bounds = array<i64: 32, 4>}, {transform_indices = @transform_2, window_bounds = array<i64: 8, 4>}]} {
    %c0 = arith.constant 0 : index
    %c0_0 = arith.constant 0 : index
    %0 = vector.load %arg2[%c0, %c0_0] : memref<8x32xf32, #tpu.memory_space<vmem>>, vector<8x32xf32>
    %1 = arith.truncf %0 : vector<8x32xf32> to vector<8x32xbf16>
    %c0_1 = arith.constant 0 : index
    %c0_2 = arith.constant 0 : index
    %2 = vector.load %arg3[%c0_1, %c0_2] : memref<32x4xbf16, #tpu.memory_space<vmem>>, vector<32x4xbf16>
    %cst = arith.constant dense<0.000000e+00> : vector<8x4xf32>
    %3 = tpu.matmul %1, %2, %cst {dimension_numbers = #tpu.dot_dimension_numbers<[1], [0], [0], [1], [0, 0, 1, 1], [], []>} : vector<8x32xbf16>, vector<32x4xbf16>, vector<8x4xf32> -> vector<8x4xf32>
    %c0_3 = arith.constant 0 : index
    %c0_4 = arith.constant 0 : index
    %4 = vector.load %arg4[%c0_3, %c0_4] : memref<8x4xf32, #tpu.memory_space<vmem>>, vector<8x4xf32>
    tpu.vector_store %arg4[%c0_3, %c0_4], %3 {strides = array<i32>} : memref<8x4xf32, #tpu.memory_space<vmem>>, vector<8x4xf32>,
    return
  }
  func.func @transform_0(%arg0: i32, %arg1: i32) -> (i32, i32) {
    %c0_i32 = arith.constant 0 : i32
    %c0_i32_0 = arith.constant 0 : i32
    return %arg0, %c0_i32 : i32, i32
  }
  func.func @transform_1(%arg0: i32, %arg1: i32) -> (i32, i32) {
    %c0_i32 = arith.constant 0 : i32
    %c0_i32_0 = arith.constant 0 : i32
    return %c0_i32, %arg1 : i32, i32
  }
  func.func @transform_2(%arg0: i32, %arg1: i32) -> (i32, i32) {
    %c0_i32 = arith.constant 0 : i32
    return %arg0, %arg1 : i32, i32
  }
}

</mosaic_0001>

<llo_original>
// kernel: tpu_custom_call.1
$region0: #{tpu_custom_call.1}
  #allocation0 [shape = 'u32[]', space=smem, size = 0x4, offset = 0x4, fixed_abs, tag = 'smem constant byte address 0x4 - core index']
  #allocation1 [shape = 'u32[144,128]{1,0:T(1,128)}', space=vmem, size = 0x12000, scoped, tag = 'internal scratch']
  %s0 = inlined_call_operand.vmem [shape: f32[8,32], index: 0, kind: input, shape index: {}]
  %s1 = inlined_call_operand.vmem [shape: bf16[32,4], index: 1, kind: input, shape index: {}]
  %s2 = inlined_call_operand.vmem [shape: f32[8,4], index: 2, kind: output, shape index: {}]
  %s3 = sld [smem:[#allocation0]]
  $region18: #{tpu_custom_call.1} parent=0
    _
  %s5 = ssub.s32 1, %s3
  %s6 = scalar_select 0, %s5, %s3
  // Predicated region
  $region2: #{tpu_custom_call.1} parent=0 // pred_check
    _
  $region3: #{tpu_custom_call.1} parent=0 // pred_check_branch
    %8 = sbr.rel (0) target = $region5
  $region4: #{tpu_custom_call.1} parent=0 // pred_region
    _
  $region5: #{tpu_custom_call.1} parent=0 // pred_fallthru
    _
  // Predicated region
  $region6: #{tpu_custom_call.1} parent=0 // pred_check
    _
  $region7: #{tpu_custom_call.1} parent=0 // pred_check_branch
    %10 = sbr.rel (0) target = $region9
  $region8: #{tpu_custom_call.1} parent=0 // pred_region
    _
  $region9: #{tpu_custom_call.1} parent=0 // pred_fallthru
    _
  %v12 = vld [vmem:[%s0] sm:$0xff]
  %v13 = vpack.c.bf16 %v12, %v12
  %v14 = vld [vmem:[%s1] sm:$0xf]
  %v15 = vld [vmem:[%s1 + $0x4] sm:$0xf]
  %v16 = vld [vmem:[%s1 + $0x8] sm:$0xf]
  %v17 = vld [vmem:[%s1 + $0xc] sm:$0xf]
  %v22 = vunpack.c.l.b16 %v14
  %v23 = vunpack.c.l.b16 %v15
  %v24 = vunpack.c.l.b16 %v16
  %v25 = vunpack.c.l.b16 %v17
  %v26 = vpack.c.b16 %v23, %v22
  %v27 = vpack.c.b16 %v25, %v24
  %vm30 = vcmask 261120
  %v32 = vsel %vm30, %v13, 0
  %34 = vmatprep.subr.bf16.mxu0 0
  %35 = vmatpush1.bf16.msra.mxu0 0
  %36 = vmatprep.subr.bf16.mxu0 0
  %37 = vmatpush1.bf16.msra.mxu0 0
  %38 = vmatprep.subr.bf16.mxu0 0
  %39 = vmatpush1.bf16.msra.mxu0 0
  %40 = vmatprep.subr.bf16.mxu0 0
  %41 = vmatpush1.bf16.msra.mxu0 0
  %42 = vmatprep.subr.bf16.mxu0 0
  %43 = vmatpush1.bf16.msra.mxu0 0
  %44 = vmatprep.subr.bf16.mxu0 0
  %45 = vmatpush1.bf16.msra.mxu0 0
  %46 = vmatprep.subr.bf16.mxu0 0
  %47 = vmatpush1.bf16.msra.mxu0 %v27
  %48 = vmatprep.subr.bf16.mxu0 0
  %49 = vmatpush1.bf16.msra.mxu0 %v26
  %50 = vmatprep.subr.bf16.mxu0 0
  %51 = vmatpush2.bf16.msra.mxu0 0
  %52 = vmatprep.subr.bf16.mxu0 0
  %53 = vmatpush2.bf16.msra.mxu0 0
  %54 = vmatprep.subr.bf16.mxu0 0
  %55 = vmatpush2.bf16.msra.mxu0 0
  %56 = vmatprep.subr.bf16.mxu0 0
  %57 = vmatpush2.bf16.msra.mxu0 0
  %58 = vmatprep.subr.bf16.mxu0 0
  %59 = vmatpush2.bf16.msra.mxu0 0
  %60 = vmatprep.subr.bf16.mxu0 0
  %61 = vmatpush2.bf16.msra.mxu0 0
  %62 = vmatprep.subr.bf16.mxu0 0
  %63 = vmatpush2.bf16.msra.mxu0 0
  %64 = vmatprep.subr.bf16.mxu0 0
  %65 = vmatpush2.bf16.msra.mxu0 0
  %66 = vmatprep.mubr.bf16.mxu0 0
  %67 = vmatmul.mubr.bf16.gmra.mxu0 %v32
  %v68 = vpop.f32.mrf.mxu0
  %v69 = vadd.f32 0.0, %v68
  %v70 = vpop.f32.mrf.mxu0
  %v71 = vpop.f32.mrf.mxu0
  %v72 = vpop.f32.mrf.mxu0
  %73 = vdwg.mxu0
  %vm74 = vcmask 31744
  %75 = vst.msk [vmem:[%s2] sm:$0xff] %vm74, %v69
  // Predicated region
  $region10: #{tpu_custom_call.1} parent=0 // pred_check
    _
  $region11: #{tpu_custom_call.1} parent=0 // pred_check_branch
    %77 = sbr.rel (0) target = $region13
  $region12: #{tpu_custom_call.1} parent=0 // pred_region
    _
  $region13: #{tpu_custom_call.1} parent=0 // pred_fallthru
    _
  // Predicated region
  $region14: #{tpu_custom_call.1} parent=0 // pred_check
    _
  $region15: #{tpu_custom_call.1} parent=0 // pred_check_branch
    %79 = sbr.rel (0) target = $region17
  $region16: #{tpu_custom_call.1} parent=0 // pred_region
    _
  $region17: #{tpu_custom_call.1} parent=0 // pred_fallthru
    _

</llo_original>
